<compile_context>
chip_gen: v7x
topology: tpu7x:2x2x1
jax: 0.10.0
libtpu: 0.0.40
codegen_flags: <defaults>
</compile_context>

<pallas_src>
import functools

import jax
import jax.numpy as jnp
from jax import lax
from jax.experimental import pallas as pl
from jax.experimental.pallas import tpu as pltpu

LANE = 128                                  # vreg lane width
FOLD_ROWS = 64                              # accumulator height for the 2-stage fold
TARGET_F32_BLOCK_BYTES = 4 * 1024 * 1024    # ~4 MiB of f32 temporaries per block


def _softplus_sum_kernel(x_ref, out_ref, *, negate, edge_rows, fold_rows):
    """Writes sum(softplus(+/-x)) over this block's valid rows to out_ref[0, 0]."""
    x = x_ref[...].astype(jnp.float32)               # (tile_rows, LANE)
    z = -x if negate else x
    # Numerically stable softplus(z) = max(z, 0) + log1p(exp(-|z|)); |z| == |x|.
    sp = jnp.maximum(z, 0.0) + jnp.log1p(jnp.exp(-jnp.abs(x)))
    # TODO(synk): on v7x with bf16 inputs the exp+log1p pair makes this EUP-bound
    # once the HBM path is optimal; a bf16 EUP variant would trade a tiny amount
    # of precision for throughput.

    def block_sum(a):
        rows = a.shape[0]
        if rows > fold_rows and rows % fold_rows == 0:
            # Short per-position add chains into a (fold_rows, LANE) accumulator,
            # then one cross-lane reduce.
            a = a.reshape(rows // fold_rows, fold_rows, LANE).sum(axis=0)
        return jnp.sum(a)

    if edge_rows is None:
        # Every block is full: unmasked fast path only (no iota, no select).
        out_ref[0, 0] = block_sum(sp)
    else:
        i = pl.program_id(0)
        last = pl.num_programs(0) - 1

        @pl.when(i < last)
        def _():
            out_ref[0, 0] = block_sum(sp)

        @pl.when(i == last)
        def _():
            # Only the single partial edge block pays for the mask.
            row = lax.broadcasted_iota(jnp.int32, sp.shape, 0)
            out_ref[0, 0] = block_sum(jnp.where(row < edge_rows, sp, 0.0))


def _softplus_sum(x, *, negate, max_block_rows=None):
    """Sum over all elements of softplus(-x) if negate else softplus(x)."""
    n = int(x.size)
    flat = x.reshape(-1)                              # layout no-op (bitcast)
    rem = n % LANE
    if rem:
        # Rare misaligned tail: pad with a value whose softplus contribution is
        # exactly 0 (softplus(-inf) == 0), so no in-kernel lane mask is needed.
        # This is the only case that costs an extra HBM copy.
        pad_val = jnp.inf if negate else -jnp.inf
        flat = jnp.concatenate(
            [flat, jnp.full((LANE - rem,), pad_val, dtype=flat.dtype)])
    x2d = flat.reshape(-1, LANE)                      # layout no-op
    rows = x2d.shape[0]

    # Block rows sized by the f32 temporary footprint, rounded to a multiple of
    # FOLD_ROWS (also a multiple of the bf16 sublane pack of 16); tiny inputs
    # collapse to a single full-extent block.
    if max_block_rows is None:
        max_block_rows = TARGET_F32_BLOCK_BYTES // (LANE * 4)   # 8192
    max_rows = max(FOLD_ROWS, (max_block_rows // FOLD_ROWS) * FOLD_ROWS)

    if rows <= max_rows:
        tile_rows, nblocks, edge_rows = rows, 1, None
    else:
        tile_rows = max_rows
        nblocks = pl.cdiv(rows, tile_rows)
        last_rows = rows - (nblocks - 1) * tile_rows
        edge_rows = None if last_rows == tile_rows else last_rows

    kernel = functools.partial(_softplus_sum_kernel, negate=negate,
                               edge_rows=edge_rows, fold_rows=FOLD_ROWS)

    partials = pl.pallas_call(
        kernel,
        out_shape=jax.ShapeDtypeStruct((nblocks, 1), jnp.float32),
        grid_spec=pltpu.PrefetchScalarGridSpec(
            num_scalar_prefetch=0,
            grid=(nblocks,),
            in_specs=[pl.BlockSpec((tile_rows, LANE), lambda i: (i, 0))],
            out_specs=pl.BlockSpec((1, 1), lambda i: (i, 0),
                                   memory_space=pltpu.MemorySpace.SMEM),
        ),
        compiler_params=pltpu.CompilerParams(
            dimension_semantics=("parallel",),        # both TCs on v7x
            vmem_limit_bytes=32 * 1024 * 1024,        # safe on v7x (64 MiB physical)
        ),
    )(x2d)

    return jnp.sum(partials)


def discriminator_loss(hr_preds, sr_preds, *, max_block_rows=None):
    n_hr = int(hr_preds.size)
    n_sr = int(sr_preds.size)
    if n_hr == 0 or n_sr == 0:
        # torch mean over an empty tensor is NaN as well.
        return jnp.float32(jnp.nan)
    real_sum = _softplus_sum(hr_preds, negate=True,
                             max_block_rows=max_block_rows)   # BCE(hr, ones)
    fake_sum = _softplus_sum(sr_preds, negate=False,
                             max_block_rows=max_block_rows)   # BCE(sr, zeros)
    return real_sum * (1.0 / n_hr) + fake_sum * (1.0 / n_sr)


def _reference(hr_preds, sr_preds):
    hr = hr_preds.astype(jnp.float32)
    sr = sr_preds.astype(jnp.float32)
    real = jnp.mean(jnp.maximum(-hr, 0.0) + jnp.log1p(jnp.exp(-jnp.abs(hr))))
    fake = jnp.mean(jnp.maximum(sr, 0.0) + jnp.log1p(jnp.exp(-jnp.abs(sr))))
    return real + fake


if __name__ == "__main__":
    key = jax.random.PRNGKey(0)
    k1, k2, k3, k4, k5, k6 = jax.random.split(key, 6)

    # 1) Patch-discriminator-style logits: NCHW [2, 1, 16, 16], f32
    #    (aligned element count -> zero-copy path, single full-extent block).
    hr = jax.random.normal(k1, (2, 1, 16, 16), dtype=jnp.float32) * 2.0
    sr = jax.random.normal(k2, (2, 1, 16, 16), dtype=jnp.float32) * 2.0
    loss = discriminator_loss(hr, sr)
    jax.block_until_ready(loss)
    ref = _reference(hr, sr)
    assert jnp.allclose(loss, ref, rtol=1e-5, atol=1e-5), (loss, ref)

    # 2) bf16 logits with a misaligned element count (exercises the +/-inf pad path).
    hr_bf = (jax.random.normal(k3, (2, 1, 17, 19)) * 2.0).astype(jnp.bfloat16)
    sr_bf = (jax.random.normal(k4, (2, 1, 16, 16)) * 2.0).astype(jnp.bfloat16)
    loss2 = discriminator_loss(hr_bf, sr_bf)
    jax.block_until_ready(loss2)
    ref2 = _reference(hr_bf, sr_bf)
    assert jnp.allclose(loss2, ref2, rtol=1e-4, atol=1e-4), (loss2, ref2)

    # 3) Multi-block grid with a partial (masked) edge block, exercised at small
    #    shapes via a reduced block-row override (9600 elems = 75 rows of 128).
    hr3 = jax.random.normal(k5, (2, 3, 40, 40), dtype=jnp.float32) * 2.0
    sr3 = jax.random.normal(k6, (2, 3, 40, 40), dtype=jnp.float32) * 2.0
    loss3 = discriminator_loss(hr3, sr3, max_block_rows=64)
    jax.block_until_ready(loss3)
    ref3 = _reference(hr3, sr3)
    assert jnp.allclose(loss3, ref3, rtol=1e-5, atol=1e-5), (loss3, ref3)

    print("KERNEL_OK")
</pallas_src>

<mosaic_0001>
module attributes {stable_mosaic.version = 11 : i64} {
  func.func @_softplus_sum_kernel(%arg0: i32, %arg1: memref<4x128xf32, #tpu.memory_space<vmem>>, %arg2: memref<1x1xf32, #tpu.memory_space<smem>>) attributes {dimension_semantics = [#tpu.dimension_semantics<parallel>], iteration_bounds = array<i64: 1>, scalar_prefetch = 0 : i64, scratch_operands = 0 : i64, tpu.core_type = #tpu.core_type<tc>, window_params = [{transform_indices = @transform_0, window_bounds = array<i64: 4, 128>}, {transform_indices = @transform_1, window_bounds = array<i64: 1, 1>}]} {
    %c0 = arith.constant 0 : index
    %c0_0 = arith.constant 0 : index
    %0 = vector.load %arg1[%c0, %c0_0] : memref<4x128xf32, #tpu.memory_space<vmem>>, vector<4x128xf32>
    %cst = arith.constant 0.000000e+00 : f32
    %1 = vector.broadcast %cst : f32 to vector<4x128xf32>
    %2 = arith.subf %1, %0 : vector<4x128xf32>
    %cst_1 = arith.constant 0.000000e+00 : f32
    %3 = vector.broadcast %cst_1 : f32 to vector<4x128xf32>
    %4 = arith.maximumf %2, %3 : vector<4x128xf32>
    %5 = math.absf %0 : vector<4x128xf32>
    %cst_2 = arith.constant 0.000000e+00 : f32
    %6 = vector.broadcast %cst_2 : f32 to vector<4x128xf32>
    %7 = arith.subf %6, %5 : vector<4x128xf32>
    %8 = math.exp %7 : vector<4x128xf32>
    %9 = math.log1p %8 : vector<4x128xf32>
    %10 = arith.addf %4, %9 : vector<4x128xf32>
    %11 = vector.shape_cast %10 : vector<4x128xf32> to vector<1x4x128xf32>
    %cst_3 = arith.constant dense<0.000000e+00> : vector<1xf32>
    %12 = vector.multi_reduction <add>, %11, %cst_3 [1, 2] : vector<1x4x128xf32> to vector<1xf32>
    %13 = vector.shape_cast %12 : vector<1xf32> to vector<1x1x1xf32>
    %14 = vector.extract %13[0, 0, 0] : f32 from vector<1x1x1xf32>
    %c0_4 = arith.constant 0 : index
    %c0_5 = arith.constant 0 : index
    %15 = memref.load %arg2[%c0_4, %c0_5] : memref<1x1xf32, #tpu.memory_space<smem>>
    memref.store %14, %arg2[%c0_4, %c0_5] : memref<1x1xf32, #tpu.memory_space<smem>>
    return
  }
  func.func @transform_0(%arg0: i32) -> (i32, i32) {
    %c0_i32 = arith.constant 0 : i32
    %c0_i32_0 = arith.constant 0 : i32
    return %arg0, %c0_i32 : i32, i32
  }
  func.func @transform_1(%arg0: i32) -> (i32, i32) {
    %c0_i32 = arith.constant 0 : i32
    %c0_i32_0 = arith.constant 0 : i32
    return %arg0, %c0_i32 : i32, i32
  }
}

</mosaic_0001>

<llo_original>
// kernel: tpu_custom_call.1
$region0: #{tpu_custom_call.1}
  #allocation0 [shape = 'u32[]', space=smem, size = 0x4, offset = 0x4, fixed_abs, tag = 'smem constant byte address 0x4 - core index']
  #allocation1 [shape = 'u32[144,128]{1,0:T(1,128)}', space=vmem, size = 0x12000, scoped, tag = 'internal scratch']
  %s0 = inlined_call_operand.hbm [shape: f32[4,128], index: 0, kind: input, shape index: {}]
  %s1 = inlined_call_operand.hbm [shape: f32[1,1], index: 1, kind: output, shape index: {}]
  %s2 = sld [smem:[#allocation0]]
  $region18: #{tpu_custom_call.1} parent=0
    _
  %s4 = ssub.s32 1, %s2
  %s5 = scalar_select 0, %s4, %s2
  $region1: #{tpu_custom_call.1} parent=0
    #allocation2 [shape = 'u8[2048]{0}', space=vmem, size = 0x800, scoped, tag = 'input window, operand 0, single buffered']
    #allocation3 [shape = 's32[1]{0}', space=sflag, size = 0x4, scoped, tag = 'scoped memory for tpu_custom_call.1']
    #allocation4 [shape = 's32[1]{0}', space=sflag, size = 0x4, scoped, tag = 'scoped memory for tpu_custom_call.1']
    #allocation5 [shape = 'u8[512]{0}', space=smem, size = 0x200, scoped, tag = 'output window, operand 0, single buffered']
    %6 = vsyncpa [#allocation3], 0
    %7 = vsyncpa [#allocation4], 0
    // Predicated region
    $region2: #{tpu_custom_call.1} parent=1 // pred_check
      _
    $region3: #{tpu_custom_call.1} parent=1 // pred_check_branch
      %9 = sbr.rel (0) target = $region5
    $region4: #{tpu_custom_call.1} parent=1 // pred_region
      %s11 = ssub.s32 64, 64
      %12 = vsyncadd [#allocation3], %s11
      %s14 = sshll.u32 [#allocation2], 4
      %s15 = int_to_ptr.vmem [resolvable:$true] %s14
      %17 = dma.hbm_to_vmem [thread:$0]  %s0, 64, %s15, [#allocation3]
    $region5: #{tpu_custom_call.1} parent=1 // pred_fallthru
      _
    // Predicated region
    $region6: #{tpu_custom_call.1} parent=1 // pred_check
      _
    $region7: #{tpu_custom_call.1} parent=1 // pred_check_branch
      %19 = sbr.rel (0) target = $region9
    $region8: #{tpu_custom_call.1} parent=1 // pred_region
      %20 = dma.done [#allocation3], 64
    $region9: #{tpu_custom_call.1} parent=1 // pred_fallthru
      _
    %v21 = vld [vmem:[#allocation2] sm:$0xf]
    %v22 = vsub.f32 0.0, %v21
    %v23 = vmax.f32 %v22, 0.0
    %v24 = vand.u32 2147483647, %v21
    %v25 = vsub.f32 0.0, %v24
    %v26 = vmul.f32 %v25, 1.442695
    %v27 = vpow.pop %v26
    %v28 = vadd.f32 %v27, 1.0
    %v29 = vlog2.pop %v28
    %v30 = vmul.f32 %v29, 0.6931472
    %v31 = vmul.f32 -0.5, %v27
    %v32 = vadd.f32 %v31, 1.0
    %v33 = vmul.f32 %v32, %v27
    %v34 = vand.u32 2147483647, %v27
    %vm35 = vcmp.lt.f32.partialorder %v34, 0.0004427343
    %v36 = vsel %vm35, %v33, %v30
    %v37 = vadd.f32 %v23, %v36
    %vm38 = vcmask 1043456
    %v39 = vsel %vm38, %v37, 0.0
    %40 = vadd.xlane.f32.xlu0 %v39
    %v41 = vpop.xlane.xlu0 %40
    %v42 = vrot.slane %v41, 4
    %v43 = vadd.f32 %v41, %v42
    %v44 = vrot.slane %v43, 2
    %v45 = vadd.f32 %v43, %v44
    %v46 = vrot.slane %v45, 1
    %v47 = vadd.f32 %v45, %v46
    %s48 = vtos %v47
    %s49 = scalar_lea.smem [#allocation5], 0
    %50 = sst [smem:[%s49]] %s48
    // Predicated region
    $region10: #{tpu_custom_call.1} parent=1 // pred_check
      _
    $region11: #{tpu_custom_call.1} parent=1 // pred_check_branch
      %52 = sbr.rel (0) target = $region13
    $region12: #{tpu_custom_call.1} parent=1 // pred_region
      %s54 = ssub.s32 16, 16
      %55 = vsyncadd [#allocation4], %s54
      %58 = dma.smem_to_hbm [#allocation5], 16, %s1, [#allocation4]
    $region13: #{tpu_custom_call.1} parent=1 // pred_fallthru
      _
    // Predicated region
    $region14: #{tpu_custom_call.1} parent=1 // pred_check
      _
    $region15: #{tpu_custom_call.1} parent=1 // pred_check_branch
      %60 = sbr.rel (0) target = $region17
    $region16: #{tpu_custom_call.1} parent=1 // pred_region
      %61 = dma.done [#allocation4], 16
    $region17: #{tpu_custom_call.1} parent=1 // pred_fallthru
      _
    %62 = sfence
    %63 = vsyncpa [#allocation3], 1
    %64 = vsyncpa [#allocation4], 1

</llo_original>
